<compile_context>
chip_gen: v6e
topology: v6e:2x2x1
jax: 0.10.0
libtpu: 0.0.40
codegen_flags: <defaults>
</compile_context>

<pallas_src>
import jax
import jax.numpy as jnp
from jax.experimental import pallas as pl
from jax.experimental.pallas import tpu as pltpu


def _rope_scale_kernel(scale_ref, x_ref, o_ref):
    # scale_ref: (1, tk) tile of the fused (cos + sin) table, in x.dtype.
    # x_ref/o_ref: (tb, tk) tiles of the (batch, fused seq*dim) input/output.
    # Implicit broadcast (1, tk) * (tb, tk); no broadcast_to, no f32 upcast.
    o_ref[...] = x_ref[...] * scale_ref[...]


def _choose_tiles(B, N, itemsize):
    """Byte-budgeted (tb, tk) tile sizes for the (B, N) elementwise scale.

    Budget: ~2 MiB per x block.  Resident VMEM ~= 2 * (x_blk + out_blk +
    scale_blk) which stays < ~9 MiB -- under the 16 MiB v5e default scoped
    limit, the 32 MiB v6e/v7x default, and v7x's 64 MiB physical VMEM.
    """
    target_block_bytes = 2 * 1024 * 1024

    # Batch tile: whole batch if small (so the scale tile is reused across the
    # entire batch in one block), otherwise a multiple of 8 (sublane axis).
    tb = B if B <= 8 else 8

    # Lane-axis tile over the fused T*D axis: multiple of 128 (lane-dense,
    # unmasked stores) unless the whole axis is smaller than one vreg row.
    if N <= 128:
        tk = N
    else:
        max_elems = max(128, target_block_bytes // max(1, tb * itemsize))
        tk = min(N, max_elems)
        tk = max(128, (tk // 128) * 128)
    return tb, tk


@jax.jit
def rotary_positional_embedding(x):
    """Matches RotaryPositionalEmbedding.forward for a 3-D input [B, T, D]."""
    B, T, D = x.shape
    N = T * D

    # inv_freq buffer + cos/sin cache contents (mirrors cos_cached/sin_cached).
    # TODO(synk): the torch module caches these statefully across calls; here
    # they are recomputed per call (cheap O(T*D)) since the kernel is pure.
    inv_freq = 1.0 / (10000.0 ** (jnp.arange(0, D, 2, dtype=jnp.float32) / D))
    t = jnp.arange(T, dtype=jnp.float32)
    freqs = t[:, None] * inv_freq[None, :]               # (T, D//2)
    emb = jnp.concatenate([freqs, freqs], axis=-1)       # (T, D)
    # cos*x + sin*x == (cos + sin) * x  -> one fused scale table, in x.dtype.
    # TODO(synk): for bf16/fp16 x PyTorch type promotion would give an f32
    # output; we keep x.dtype (exact match for the f32 case tested here).
    scale = (jnp.cos(emb) + jnp.sin(emb)).astype(x.dtype)  # (T, D)

    # Fold (T, D) onto the lane axis so blocks are lane-dense even for small D.
    x2 = x.reshape(B, N)
    scale2 = scale.reshape(1, N)

    itemsize = jnp.dtype(x.dtype).itemsize
    tb, tk = _choose_tiles(B, N, itemsize)
    # Batch innermost (varies fastest) -> scale block index is constant across
    # consecutive grid steps and its DMA is skipped.
    grid = (pl.cdiv(N, tk), pl.cdiv(B, tb))

    cost = pl.CostEstimate(
        flops=x.size,                                     # one multiply / elem
        transcendentals=0,
        bytes_accessed=2 * x.size * itemsize + N * itemsize,
    )

    out = pl.pallas_call(
        _rope_scale_kernel,
        out_shape=jax.ShapeDtypeStruct((B, N), x.dtype),
        grid_spec=pltpu.PrefetchScalarGridSpec(
            num_scalar_prefetch=0,
            grid=grid,
            in_specs=[
                pl.BlockSpec((1, tk), lambda i, b: (0, i)),    # scale tile
                pl.BlockSpec((tb, tk), lambda i, b: (b, i)),   # x tile
            ],
            out_specs=pl.BlockSpec((tb, tk), lambda i, b: (b, i)),
        ),
        compiler_params=pltpu.CompilerParams(
            dimension_semantics=("parallel", "parallel")),
        cost_estimate=cost,
    )(scale2, x2)

    # Reproduce PyTorch broadcasting: [1,1,T,D] * [B,T,D] -> [1,B,T,D].
    return out.reshape(B, T, D)[None]


def rope_reference(x):
    """Pure-JAX mirror of the PyTorch module's forward."""
    seq_len = x.shape[1]
    dim = x.shape[-1]
    inv_freq = 1.0 / (10000.0 ** (jnp.arange(0, dim, 2, dtype=jnp.float32) / dim))
    t = jnp.arange(seq_len, dtype=jnp.float32)
    freqs = jnp.einsum("i,j->ij", t, inv_freq)
    emb = jnp.concatenate([freqs, freqs], axis=-1)
    cos = jnp.cos(emb)[None, None, :, :]
    sin = jnp.sin(emb)[None, None, :, :]
    return cos * x + sin * x


if __name__ == "__main__":
    B, T, D = 2, 8, 32  # small shapes consistent with the module (dim even)

    key = jax.random.PRNGKey(0)
    x = jax.random.normal(key, (B, T, D), dtype=jnp.float32)

    y = rotary_positional_embedding(x)
    y = jax.block_until_ready(y)

    y_ref = rope_reference(x)
    assert y.shape == y_ref.shape == (1, B, T, D), (y.shape, y_ref.shape)
    assert jnp.allclose(y, y_ref, atol=1e-5, rtol=1e-5), "mismatch vs reference"

    print("KERNEL_OK")
</pallas_src>

<mosaic_0001>
module attributes {stable_mosaic.version = 11 : i64} {
  func.func @_rope_scale_kernel(%arg0: i32, %arg1: i32, %arg2: memref<1x256xf32, #tpu.memory_space<vmem>>, %arg3: memref<2x256xf32, #tpu.memory_space<vmem>>, %arg4: memref<2x256xf32, #tpu.memory_space<vmem>>) attributes {dimension_semantics = [#tpu.dimension_semantics<parallel>, #tpu.dimension_semantics<parallel>], iteration_bounds = array<i64: 1, 1>, scalar_prefetch = 0 : i64, scratch_operands = 0 : i64, tpu.core_type = #tpu.core_type<tc>, window_params = [{transform_indices = @transform_0, window_bounds = array<i64: 1, 256>}, {transform_indices = @transform_1, window_bounds = array<i64: 2, 256>}, {transform_indices = @transform_2, window_bounds = array<i64: 2, 256>}]} {
    %c0 = arith.constant 0 : index
    %c0_0 = arith.constant 0 : index
    %0 = vector.load %arg3[%c0, %c0_0] : memref<2x256xf32, #tpu.memory_space<vmem>>, vector<2x256xf32>
    %c0_1 = arith.constant 0 : index
    %c0_2 = arith.constant 0 : index
    %1 = vector.load %arg2[%c0_1, %c0_2] : memref<1x256xf32, #tpu.memory_space<vmem>>, vector<1x256xf32>
    %2 = vector.broadcast %1 : vector<1x256xf32> to vector<2x256xf32>
    %3 = arith.mulf %0, %2 : vector<2x256xf32>
    %c0_3 = arith.constant 0 : index
    %c0_4 = arith.constant 0 : index
    %4 = vector.load %arg4[%c0_3, %c0_4] : memref<2x256xf32, #tpu.memory_space<vmem>>, vector<2x256xf32>
    tpu.vector_store %arg4[%c0_3, %c0_4], %3 {strides = array<i32>} : memref<2x256xf32, #tpu.memory_space<vmem>>, vector<2x256xf32>,
    return
  }
  func.func @transform_0(%arg0: i32, %arg1: i32) -> (i32, i32) {
    %c0_i32 = arith.constant 0 : i32
    %c0_i32_0 = arith.constant 0 : i32
    return %c0_i32, %arg0 : i32, i32
  }
  func.func @transform_1(%arg0: i32, %arg1: i32) -> (i32, i32) {
    %c0_i32 = arith.constant 0 : i32
    return %arg1, %arg0 : i32, i32
  }
  func.func @transform_2(%arg0: i32, %arg1: i32) -> (i32, i32) {
    %c0_i32 = arith.constant 0 : i32
    return %arg1, %arg0 : i32, i32
  }
}

</mosaic_0001>

<llo_original>
// kernel: rotary_positional_embedding.1
$region0: #{rotary_positional_embedding.1}
  #allocation0 [shape = 'u32[]', space=smem, size = 0x4, offset = 0x4, fixed_abs, tag = 'smem constant byte address 0x4 - core index']
  #allocation1 [shape = 'u32[144,128]{1,0:T(1,128)}', space=vmem, size = 0x12000, scoped, tag = 'internal scratch']
  %s0 = inlined_call_operand.vmem [shape: f32[1,256], index: 0, kind: input, shape index: {}]
  %s1 = inlined_call_operand.vmem [shape: f32[2,256], index: 1, kind: input, shape index: {}]
  %s2 = inlined_call_operand.vmem [shape: f32[2,256], index: 2, kind: output, shape index: {}]
  %s3 = sld [smem:[#allocation0]]
  $region18: #{rotary_positional_embedding.1} parent=0
    _
  %s5 = ssub.s32 1, %s3
  %s6 = scalar_select 0, %s5, %s3
  // Predicated region
  $region2: #{rotary_positional_embedding.1} parent=0 // pred_check
    _
  $region3: #{rotary_positional_embedding.1} parent=0 // pred_check_branch
    %8 = sbr.rel (0) target = $region5
  $region4: #{rotary_positional_embedding.1} parent=0 // pred_region
    _
  $region5: #{rotary_positional_embedding.1} parent=0 // pred_fallthru
    _
  // Predicated region
  $region6: #{rotary_positional_embedding.1} parent=0 // pred_check
    _
  $region7: #{rotary_positional_embedding.1} parent=0 // pred_check_branch
    %10 = sbr.rel (0) target = $region9
  $region8: #{rotary_positional_embedding.1} parent=0 // pred_region
    _
  $region9: #{rotary_positional_embedding.1} parent=0 // pred_fallthru
    _
  %v11 = vld [vmem:[%s1] sm:$0xf]
  %v12 = vld [vmem:[%s0] sm:$0x3]
  %v14 = vlaneseq
  %v15 = vshrl.u32 %v14, 7
  %v16 = vsub.s32 0, %v15
  %v17 = vrot.slane %v12, %v16
  %v18 = vlaneseq
  %v19 = vshrl.u32 %v18, 7
  %v20 = vsub.s32 1, %v19
  %v21 = vrot.slane %v12, %v20
  %v22 = vcombine.low %v17, %v21
  %v24 = vunpack.c.l.s4 1983009808
  %v25 = vunpack.c.0.s8 %v24
  %v26 = vlaneseq
  %v27 = vshrl.u32 %v26, 7
  %v28 = vsub.s32 %v25, %v27
  %v29 = vrot.slane %v22, %v28
  %v31 = vmul.f32 %v11, %v29
  %32 = vst [vmem:[%s2] sm:$0xf] %v31
  // Predicated region
  $region10: #{rotary_positional_embedding.1} parent=0 // pred_check
    _
  $region11: #{rotary_positional_embedding.1} parent=0 // pred_check_branch
    %34 = sbr.rel (0) target = $region13
  $region12: #{rotary_positional_embedding.1} parent=0 // pred_region
    _
  $region13: #{rotary_positional_embedding.1} parent=0 // pred_fallthru
    _
  // Predicated region
  $region14: #{rotary_positional_embedding.1} parent=0 // pred_check
    _
  $region15: #{rotary_positional_embedding.1} parent=0 // pred_check_branch
    %36 = sbr.rel (0) target = $region17
  $region16: #{rotary_positional_embedding.1} parent=0 // pred_region
    _
  $region17: #{rotary_positional_embedding.1} parent=0 // pred_fallthru
    _

</llo_original>
